<compile_context>
chip_gen: v6e
topology: v6e:2x2x1
jax: 0.10.0
libtpu: 0.0.40
codegen_flags: <defaults>
</compile_context>

<pallas_src>
import functools

import jax
import jax.numpy as jnp
from jax import lax
from jax.experimental import pallas as pl
from jax.experimental.pallas import tpu as pltpu


# ------------------------------------------------------------------ #
# Kernel A: inner `nn`  (Linear + ReLU, per-batch max-pool over N)   #
# ------------------------------------------------------------------ #
def nn_kernel(batch_ref, feat_ref, w1_ref, b1_ref, gf_ref, *, num_batches):
    # batch_ref: [1, T] int32 point->batch ids (padded points carry id == num_batches)
    # feat_ref:  [C_in, T] (bf16)   w1_ref: [F, C_in] f32   b1_ref: [F, 1] f32
    # gf_ref:    [B, F] f32 per-core resident accumulator (leading "core" grid axis squeezed)
    @pl.when(pl.program_id(1) == 0)
    def _init():
        gf_ref[...] = jnp.zeros_like(gf_ref)        # finite sentinel; exact since h >= 0

    feat = feat_ref[...].astype(jnp.float32)                             # cast right after load
    h = jnp.dot(w1_ref[...], feat, preferred_element_type=jnp.float32)   # [F, T]
    h = jnp.maximum(h + b1_ref[...], 0.0)                                # ReLU -> h >= 0
    bids = batch_ref[...]                                                # [1, T]
    # Per-batch masked max: only one [F, T] temp live at a time (no [B, F, T] intermediate).
    for b in range(num_batches):
        hb = jnp.where(bids == b, h, 0.0)                                # [F, T]
        gf_ref[b, :] = jnp.maximum(gf_ref[b, :], jnp.max(hb, axis=-1))


# ------------------------------------------------------------------ #
# Kernel B: apply per-point linear transform + pass-through copy     #
# ------------------------------------------------------------------ #
def apply_kernel(batch_ref, x_ref, tt_ref, out_ref, *, k, num_batches):
    # batch_ref: [1, T] int32   x_ref: [D, T] (bf16)   tt_ref: [k*k, B] f32   out_ref: [D, T]
    # out[j, n] = sum_i x[i, n] * trans[batch[n], i, j] for j < k ; out[j, n] = x[j, n] for j >= k
    T = out_ref.shape[1]
    x_all = x_ref[...]                                                   # [D, T] (input dtype)
    xf = x_all[:k, :].astype(jnp.float32)                                # cast hoisted out of loops
    bids = batch_ref[...]                                                # [1, T]
    rows = lax.broadcasted_iota(jnp.int32, (num_batches, T), 0)
    onehot = (rows == bids).astype(jnp.float32)                          # [B, T] built in-kernel
    # gather per-point transform columns: [k*k, B] @ [B, T] -> [k*k, T]
    tp = jnp.dot(tt_ref[...], onehot, preferred_element_type=jnp.float32)
    for j in range(k):                                                   # k static & small -> VPU FMAs
        acc = xf[0, :] * tp[j, :]
        for i in range(1, k):
            acc = acc + xf[i, :] * tp[i * k + j, :]
        out_ref[j, :] = acc.astype(out_ref.dtype)                        # full-lane store
    if out_ref.shape[0] > k:                                             # pass-through channels
        out_ref[k:, :] = x_all[k:, :].astype(out_ref.dtype)


# ------------------------------------------------------------------ #
# Wrapper                                                            #
# ------------------------------------------------------------------ #
def stn_forward(feat_x, trans_x, batch, params, *, batch_size, k, tile_n=2048):
    """feat_x: [N, C_in], trans_x: [N, D], batch: [N] int -> (out [N, D], trans [B, k, k])."""
    w1, b1, w2, b2 = params
    N, c_in = feat_x.shape
    D = trans_x.shape[1]
    F = w1.shape[1]
    B = batch_size
    assert D >= k

    num_tiles = pl.cdiv(N, tile_n)
    ncores = 2 if num_tiles >= 2 else 1              # split the reduction for v7x megacore
    tiles_total = pl.cdiv(num_tiles, ncores) * ncores
    tiles_per_core = tiles_total // ncores
    n_pad = tiles_total * tile_n
    pad = n_pad - N

    # channels-first lane-dense layout (one layout pass each way in the wrapper)
    feat_cf = feat_x.T                                        # [C_in, N]
    x_cf = trans_x.T                                          # [D, N] full tensor (pass-through in-kernel)
    bids = batch.astype(jnp.int32).reshape(1, N)              # [1, N]
    if pad:
        feat_cf = jnp.pad(feat_cf, ((0, 0), (0, pad)))
        x_cf = jnp.pad(x_cf, ((0, 0), (0, pad)))
        bids = jnp.pad(bids, ((0, 0), (0, pad)), constant_values=B)   # out-of-range id -> masked out

    w1_t = w1.T.astype(jnp.float32)                           # [F, C_in]
    b1_col = b1.reshape(F, 1).astype(jnp.float32)             # [F, 1]

    # ---- global feature: tiled, per-core-partial segment max-pool -------------------------
    gf_parts = pl.pallas_call(
        functools.partial(nn_kernel, num_batches=B),
        out_shape=jax.ShapeDtypeStruct((ncores, B, F), jnp.float32),
        grid=(ncores, tiles_per_core),
        in_specs=[
            pl.BlockSpec((1, tile_n), lambda c, i: (0, c * tiles_per_core + i)),
            pl.BlockSpec((c_in, tile_n), lambda c, i: (0, c * tiles_per_core + i)),
            pl.BlockSpec((F, c_in), lambda c, i: (0, 0)),
            pl.BlockSpec((F, 1), lambda c, i: (0, 0)),
        ],
        out_specs=pl.BlockSpec((None, B, F), lambda c, i: (c, 0, 0)),   # per-core resident partial
        compiler_params=pltpu.CompilerParams(
            dimension_semantics=("parallel", "arbitrary")),
    )(bids, feat_cf, w1_t, b1_col)
    gf = jnp.max(gf_parts, axis=0)                            # combine partials (exact: h >= 0)

    # ---- fc layer + identity: trivially small -> plain JAX (fused by XLA) -----------------
    eye_flat = jnp.eye(k, dtype=jnp.float32).reshape(1, k * k)
    trans_flat = gf @ w2.astype(jnp.float32) + b2.astype(jnp.float32).reshape(1, k * k) + eye_flat
    trans = trans_flat.reshape(B, k, k)
    trans_t = trans_flat.T                                    # [k*k, B]; tt[i*k+j, b] = trans[b, i, j]

    # ---- apply per-point transform (pass-through rows written in-kernel) ------------------
    out_cf = pl.pallas_call(
        functools.partial(apply_kernel, k=k, num_batches=B),
        out_shape=jax.ShapeDtypeStruct((D, n_pad), trans_x.dtype),
        grid=(tiles_total,),
        in_specs=[
            pl.BlockSpec((1, tile_n), lambda i: (0, i)),
            pl.BlockSpec((D, tile_n), lambda i: (0, i)),
            pl.BlockSpec((k * k, B), lambda i: (0, 0)),
        ],
        out_specs=pl.BlockSpec((D, tile_n), lambda i: (0, i)),
        compiler_params=pltpu.CompilerParams(dimension_semantics=("parallel",)),
    )(bids, x_cf, trans_t)

    out = out_cf[:, :N].T                                     # [N, D], single layout pass
    return out, trans


if __name__ == "__main__":
    # small deterministic problem; tile_n=256 exercises multi-tile grid, padding and the
    # 2-way parallel reduction split.
    B, N, C_IN, F, K, D = 2, 1000, 4, 32, 3, 6
    TILE_N = 256

    key = jax.random.PRNGKey(0)
    k1, k2, k3, k4, k5, k6, k7 = jax.random.split(key, 7)

    feat_f32 = jax.random.normal(k1, (N, C_IN), jnp.float32)
    x_f32 = jax.random.normal(k2, (N, D), jnp.float32)
    batch = (jax.random.uniform(k7, (N,)) < 0.5).astype(jnp.int32)   # unsorted point->batch map

    # bf16 point streams (halve HBM traffic); params stay f32
    feat_x = feat_f32.astype(jnp.bfloat16)
    trans_x = x_f32.astype(jnp.bfloat16)

    # inner `nn` params (Linear C_IN -> F)
    w1 = 0.1 * jax.random.normal(k3, (C_IN, F), jnp.float32)
    b1 = 0.1 * jax.random.normal(k4, (F,), jnp.float32)
    # fc_layer params (Linear F -> k*k); PyTorch zero-inits these (=> identity transform)
    w2 = 0.05 * jax.random.normal(k5, (F, K * K), jnp.float32)
    b2 = 0.05 * jax.random.normal(k6, (K * K,), jnp.float32)
    params = (w1, b1, w2, b2)

    fwd = jax.jit(stn_forward, static_argnames=("batch_size", "k", "tile_n"))
    out, trans = fwd(feat_x, trans_x, batch, params, batch_size=B, k=K, tile_n=TILE_N)
    out = jax.block_until_ready(out)

    # plain-JAX reference, computed in f32 from the same bf16-rounded inputs
    feat_r = feat_x.astype(jnp.float32)
    x_r = trans_x.astype(jnp.float32)
    h = jnp.maximum(feat_r @ w1 + b1[None, :], 0.0)
    gf_ref = jnp.stack(
        [jnp.max(jnp.where(batch[:, None] == b, h, 0.0), axis=0) for b in range(B)]
    )
    trans_ref = (gf_ref @ w2 + b2[None, :] + jnp.eye(K).reshape(1, K * K)).reshape(B, K, K)
    out_k_ref = jnp.einsum("nk,nkj->nj", x_r[:, :K], trans_ref[batch])
    out_ref = jnp.concatenate([out_k_ref, x_r[:, K:]], axis=-1)

    assert out.shape == (N, D)
    assert jnp.allclose(trans, trans_ref, atol=1e-4, rtol=1e-4), \
        float(jnp.max(jnp.abs(trans - trans_ref)))
    out_f32 = out.astype(jnp.float32)
    assert jnp.allclose(out_f32, out_ref, atol=2e-2, rtol=2e-2), \
        float(jnp.max(jnp.abs(out_f32 - out_ref)))
    print("KERNEL_OK")
</pallas_src>

<mosaic_0001>
module attributes {stable_mosaic.version = 11 : i64} {
  func.func @apply_kernel(%arg0: i32, %arg1: memref<1x256xi32, #tpu.memory_space<vmem>>, %arg2: memref<6x256xbf16, #tpu.memory_space<vmem>>, %arg3: memref<9x2xf32, #tpu.memory_space<vmem>>, %arg4: memref<6x256xbf16, #tpu.memory_space<vmem>>) attributes {dimension_semantics = [#tpu.dimension_semantics<parallel>], iteration_bounds = array<i64: 4>, scalar_prefetch = 0 : i64, scratch_operands = 0 : i64, tpu.core_type = #tpu.core_type<tc>, window_params = [{transform_indices = @transform_0, window_bounds = array<i64: 1, 256>}, {transform_indices = @transform_1, window_bounds = array<i64: 6, 256>}, {pipeline_mode = #tpu.pipeline_mode<synchronous>, transform_indices = @transform_2, window_bounds = array<i64: 9, 2>}, {transform_indices = @transform_3, window_bounds = array<i64: 6, 256>}]} {
    %c0 = arith.constant 0 : index
    %c0_0 = arith.constant 0 : index
    %0 = vector.load %arg2[%c0, %c0_0] : memref<6x256xbf16, #tpu.memory_space<vmem>>, vector<6x256xbf16>
    %1 = vector.extract_strided_slice %0 {offsets = [0, 0], sizes = [3, 256], strides = [1, 1]} : vector<6x256xbf16> to vector<3x256xbf16>
    %2 = arith.extf %1 : vector<3x256xbf16> to vector<3x256xf32>
    %c0_1 = arith.constant 0 : index
    %c0_2 = arith.constant 0 : index
    %3 = vector.load %arg1[%c0_1, %c0_2] : memref<1x256xi32, #tpu.memory_space<vmem>>, vector<1x256xi32>
    %4 = tpu.iota {dimensions = array<i32: 0>} : vector<2x256xi32>
    %5 = vector.broadcast %3 : vector<1x256xi32> to vector<2x256xi32>
    %6 = arith.cmpi eq, %4, %5 : vector<2x256xi32>
    %7 = arith.extui %6 : vector<2x256xi1> to vector<2x256xi32>
    %8 = arith.sitofp %7 : vector<2x256xi32> to vector<2x256xf32>
    %c0_3 = arith.constant 0 : index
    %c0_4 = arith.constant 0 : index
    %9 = vector.load %arg3[%c0_3, %c0_4] : memref<9x2xf32, #tpu.memory_space<vmem>>, vector<9x2xf32>
    %cst = arith.constant dense<0.000000e+00> : vector<9x256xf32>
    %10 = tpu.matmul %9, %8, %cst {dimension_numbers = #tpu.dot_dimension_numbers<[1], [0], [0], [1], [0, 0, 1, 1], [], []>} : vector<9x2xf32>, vector<2x256xf32>, vector<9x256xf32> -> vector<9x256xf32>
    %11 = vector.extract_strided_slice %2 {offsets = [0, 0], sizes = [1, 256], strides = [1, 1]} : vector<3x256xf32> to vector<1x256xf32>
    %12 = vector.shape_cast %11 : vector<1x256xf32> to vector<256xf32>
    %13 = vector.extract_strided_slice %10 {offsets = [0, 0], sizes = [1, 256], strides = [1, 1]} : vector<9x256xf32> to vector<1x256xf32>
    %14 = vector.shape_cast %13 : vector<1x256xf32> to vector<256xf32>
    %15 = arith.mulf %12, %14 : vector<256xf32>
    %16 = vector.extract_strided_slice %2 {offsets = [1, 0], sizes = [1, 256], strides = [1, 1]} : vector<3x256xf32> to vector<1x256xf32>
    %17 = vector.shape_cast %16 : vector<1x256xf32> to vector<256xf32>
    %18 = vector.extract_strided_slice %10 {offsets = [3, 0], sizes = [1, 256], strides = [1, 1]} : vector<9x256xf32> to vector<1x256xf32>
    %19 = vector.shape_cast %18 : vector<1x256xf32> to vector<256xf32>
    %20 = arith.mulf %17, %19 : vector<256xf32>
    %21 = arith.addf %15, %20 : vector<256xf32>
    %22 = vector.extract_strided_slice %2 {offsets = [2, 0], sizes = [1, 256], strides = [1, 1]} : vector<3x256xf32> to vector<1x256xf32>
    %23 = vector.shape_cast %22 : vector<1x256xf32> to vector<256xf32>
    %24 = vector.extract_strided_slice %10 {offsets = [6, 0], sizes = [1, 256], strides = [1, 1]} : vector<9x256xf32> to vector<1x256xf32>
    %25 = vector.shape_cast %24 : vector<1x256xf32> to vector<256xf32>
    %26 = arith.mulf %23, %25 : vector<256xf32>
    %27 = arith.addf %21, %26 : vector<256xf32>
    %28 = arith.truncf %27 : vector<256xf32> to vector<256xbf16>
    %c0_5 = arith.constant 0 : index
    %c0_6 = arith.constant 0 : index
    %29 = vector.load %arg4[%c0_5, %c0_6] : memref<6x256xbf16, #tpu.memory_space<vmem>>, vector<1x256xbf16>
    %30 = vector.shape_cast %29 : vector<1x256xbf16> to vector<256xbf16>
    %31 = vector.shape_cast %28 : vector<256xbf16> to vector<1x256xbf16>
    tpu.vector_store %arg4[%c0_5, %c0_6], %31 {strides = array<i32>} : memref<6x256xbf16, #tpu.memory_space<vmem>>, vector<1x256xbf16>,
    %32 = vector.extract_strided_slice %2 {offsets = [0, 0], sizes = [1, 256], strides = [1, 1]} : vector<3x256xf32> to vector<1x256xf32>
    %33 = vector.shape_cast %32 : vector<1x256xf32> to vector<256xf32>
    %34 = vector.extract_strided_slice %10 {offsets = [1, 0], sizes = [1, 256], strides = [1, 1]} : vector<9x256xf32> to vector<1x256xf32>
    %35 = vector.shape_cast %34 : vector<1x256xf32> to vector<256xf32>
    %36 = arith.mulf %33, %35 : vector<256xf32>
    %37 = vector.extract_strided_slice %2 {offsets = [1, 0], sizes = [1, 256], strides = [1, 1]} : vector<3x256xf32> to vector<1x256xf32>
    %38 = vector.shape_cast %37 : vector<1x256xf32> to vector<256xf32>
    %39 = vector.extract_strided_slice %10 {offsets = [4, 0], sizes = [1, 256], strides = [1, 1]} : vector<9x256xf32> to vector<1x256xf32>
    %40 = vector.shape_cast %39 : vector<1x256xf32> to vector<256xf32>
    %41 = arith.mulf %38, %40 : vector<256xf32>
    %42 = arith.addf %36, %41 : vector<256xf32>
    %43 = vector.extract_strided_slice %2 {offsets = [2, 0], sizes = [1, 256], strides = [1, 1]} : vector<3x256xf32> to vector<1x256xf32>
    %44 = vector.shape_cast %43 : vector<1x256xf32> to vector<256xf32>
    %45 = vector.extract_strided_slice %10 {offsets = [7, 0], sizes = [1, 256], strides = [1, 1]} : vector<9x256xf32> to vector<1x256xf32>
    %46 = vector.shape_cast %45 : vector<1x256xf32> to vector<256xf32>
    %47 = arith.mulf %44, %46 : vector<256xf32>
    %48 = arith.addf %42, %47 : vector<256xf32>
    %49 = arith.truncf %48 : vector<256xf32> to vector<256xbf16>
    %c1 = arith.constant 1 : index
    %c0_7 = arith.constant 0 : index
    %50 = vector.load %arg4[%c1, %c0_7] : memref<6x256xbf16, #tpu.memory_space<vmem>>, vector<1x256xbf16>
    %51 = vector.shape_cast %50 : vector<1x256xbf16> to vector<256xbf16>
    %52 = vector.shape_cast %49 : vector<256xbf16> to vector<1x256xbf16>
    tpu.vector_store %arg4[%c1, %c0_7], %52 {strides = array<i32>} : memref<6x256xbf16, #tpu.memory_space<vmem>>, vector<1x256xbf16>,
    %53 = vector.extract_strided_slice %2 {offsets = [0, 0], sizes = [1, 256], strides = [1, 1]} : vector<3x256xf32> to vector<1x256xf32>
    %54 = vector.shape_cast %53 : vector<1x256xf32> to vector<256xf32>
    %55 = vector.extract_strided_slice %10 {offsets = [2, 0], sizes = [1, 256], strides = [1, 1]} : vector<9x256xf32> to vector<1x256xf32>
    %56 = vector.shape_cast %55 : vector<1x256xf32> to vector<256xf32>
    %57 = arith.mulf %54, %56 : vector<256xf32>
    %58 = vector.extract_strided_slice %2 {offsets = [1, 0], sizes = [1, 256], strides = [1, 1]} : vector<3x256xf32> to vector<1x256xf32>
    %59 = vector.shape_cast %58 : vector<1x256xf32> to vector<256xf32>
    %60 = vector.extract_strided_slice %10 {offsets = [5, 0], sizes = [1, 256], strides = [1, 1]} : vector<9x256xf32> to vector<1x256xf32>
    %61 = vector.shape_cast %60 : vector<1x256xf32> to vector<256xf32>
    %62 = arith.mulf %59, %61 : vector<256xf32>
    %63 = arith.addf %57, %62 : vector<256xf32>
    %64 = vector.extract_strided_slice %2 {offsets = [2, 0], sizes = [1, 256], strides = [1, 1]} : vector<3x256xf32> to vector<1x256xf32>
    %65 = vector.shape_cast %64 : vector<1x256xf32> to vector<256xf32>
    %66 = vector.extract_strided_slice %10 {offsets = [8, 0], sizes = [1, 256], strides = [1, 1]} : vector<9x256xf32> to vector<1x256xf32>
    %67 = vector.shape_cast %66 : vector<1x256xf32> to vector<256xf32>
    %68 = arith.mulf %65, %67 : vector<256xf32>
    %69 = arith.addf %63, %68 : vector<256xf32>
    %70 = arith.truncf %69 : vector<256xf32> to vector<256xbf16>
    %c2 = arith.constant 2 : index
    %c0_8 = arith.constant 0 : index
    %71 = vector.load %arg4[%c2, %c0_8] : memref<6x256xbf16, #tpu.memory_space<vmem>>, vector<1x256xbf16>
    %72 = vector.shape_cast %71 : vector<1x256xbf16> to vector<256xbf16>
    %73 = vector.shape_cast %70 : vector<256xbf16> to vector<1x256xbf16>
    tpu.vector_store %arg4[%c2, %c0_8], %73 {strides = array<i32>} : memref<6x256xbf16, #tpu.memory_space<vmem>>, vector<1x256xbf16>,
    %74 = vector.extract_strided_slice %0 {offsets = [3, 0], sizes = [3, 256], strides = [1, 1]} : vector<6x256xbf16> to vector<3x256xbf16>
    %c3 = arith.constant 3 : index
    %c0_9 = arith.constant 0 : index
    %75 = vector.load %arg4[%c3, %c0_9] : memref<6x256xbf16, #tpu.memory_space<vmem>>, vector<3x256xbf16>
    tpu.vector_store %arg4[%c3, %c0_9], %74 {strides = array<i32>} : memref<6x256xbf16, #tpu.memory_space<vmem>>, vector<3x256xbf16>,
    return
  }
  func.func @transform_0(%arg0: i32) -> (i32, i32) {
    %c0_i32 = arith.constant 0 : i32
    %c0_i32_0 = arith.constant 0 : i32
    return %c0_i32, %arg0 : i32, i32
  }
  func.func @transform_1(%arg0: i32) -> (i32, i32) {
    %c0_i32 = arith.constant 0 : i32
    %c0_i32_0 = arith.constant 0 : i32
    return %c0_i32, %arg0 : i32, i32
  }
  func.func @transform_2(%arg0: i32) -> (i32, i32) {
    %c0_i32 = arith.constant 0 : i32
    %c0_i32_0 = arith.constant 0 : i32
    %c0_i32_1 = arith.constant 0 : i32
    return %c0_i32, %c0_i32_0 : i32, i32
  }
  func.func @transform_3(%arg0: i32) -> (i32, i32) {
    %c0_i32 = arith.constant 0 : i32
    %c0_i32_0 = arith.constant 0 : i32
    return %c0_i32, %arg0 : i32, i32
  }
}

module attributes {stable_mosaic.version = 11 : i64} {
  func.func @nn_kernel(%arg0: i32, %arg1: i32, %arg2: memref<1x256xi32, #tpu.memory_space<vmem>>, %arg3: memref<4x256xbf16, #tpu.memory_space<vmem>>, %arg4: memref<32x4xf32, #tpu.memory_space<vmem>>, %arg5: memref<32x1xf32, #tpu.memory_space<vmem>>, %arg6: memref<1x2x32xf32, #tpu.memory_space<vmem>>) attributes {dimension_semantics = [#tpu.dimension_semantics<parallel>, #tpu.dimension_semantics<arbitrary>], iteration_bounds = array<i64: 2, 2>, scalar_prefetch = 0 : i64, scratch_operands = 0 : i64, tpu.core_type = #tpu.core_type<tc>, window_params = [{transform_indices = @transform_0, window_bounds = array<i64: 1, 256>}, {transform_indices = @transform_1, window_bounds = array<i64: 4, 256>}, {pipeline_mode = #tpu.pipeline_mode<synchronous>, transform_indices = @transform_2, window_bounds = array<i64: 32, 4>}, {pipeline_mode = #tpu.pipeline_mode<synchronous>, transform_indices = @transform_3, window_bounds = array<i64: 32, 1>}, {transform_indices = @transform_4, window_bounds = array<i64: 1, 2, 32>}]} {
    %c0_i32 = arith.constant 0 : i32
    %0 = arith.cmpi eq, %arg1, %c0_i32 : i32
    %1 = arith.extui %0 : i1 to i32
    %c0_i32_0 = arith.constant 0 : i32
    %2 = arith.cmpi ne, %1, %c0_i32_0 : i32
    scf.if %2 {
      %cst_25 = arith.constant 0.000000e+00 : f32
      %39 = vector.broadcast %cst_25 : f32 to vector<2x32xf32>
      %c0_26 = arith.constant 0 : index
      %c0_27 = arith.constant 0 : index
      %c0_28 = arith.constant 0 : index
      %40 = vector.load %arg6[%c0_26, %c0_27, %c0_28] : memref<1x2x32xf32, #tpu.memory_space<vmem>>, vector<1x2x32xf32>
      %41 = vector.shape_cast %40 : vector<1x2x32xf32> to vector<2x32xf32>
      %42 = vector.shape_cast %39 : vector<2x32xf32> to vector<1x2x32xf32>
      tpu.vector_store %arg6[%c0_26, %c0_27, %c0_28], %42 {strides = array<i32>} : memref<1x2x32xf32, #tpu.memory_space<vmem>>, vector<1x2x32xf32>,
    } else {
    }
    %c0 = arith.constant 0 : index
    %c0_1 = arith.constant 0 : index
    %3 = vector.load %arg3[%c0, %c0_1] : memref<4x256xbf16, #tpu.memory_space<vmem>>, vector<4x256xbf16>
    %4 = arith.extf %3 : vector<4x256xbf16> to vector<4x256xf32>
    %c0_2 = arith.constant 0 : index
    %c0_3 = arith.constant 0 : index
    %5 = vector.load %arg4[%c0_2, %c0_3] : memref<32x4xf32, #tpu.memory_space<vmem>>, vector<32x4xf32>
    %cst = arith.constant dense<0.000000e+00> : vector<32x256xf32>
    %6 = tpu.matmul %5, %4, %cst {dimension_numbers = #tpu.dot_dimension_numbers<[1], [0], [0], [1], [0, 0, 1, 1], [], []>} : vector<32x4xf32>, vector<4x256xf32>, vector<32x256xf32> -> vector<32x256xf32>
    %c0_4 = arith.constant 0 : index
    %c0_5 = arith.constant 0 : index
    %7 = vector.load %arg5[%c0_4, %c0_5] : memref<32x1xf32, #tpu.memory_space<vmem>>, vector<32x1xf32>
    %8 = vector.broadcast %7 : vector<32x1xf32> to vector<32x256xf32>
    %9 = arith.addf %6, %8 : vector<32x256xf32>
    %cst_6 = arith.constant 0.000000e+00 : f32
    %10 = vector.broadcast %cst_6 : f32 to vector<32x256xf32>
    %11 = arith.maximumf %9, %10 : vector<32x256xf32>
    %c0_7 = arith.constant 0 : index
    %c0_8 = arith.constant 0 : index
    %12 = vector.load %arg2[%c0_7, %c0_8] : memref<1x256xi32, #tpu.memory_space<vmem>>, vector<1x256xi32>
    %c0_i32_9 = arith.constant 0 : i32
    %13 = vector.broadcast %c0_i32_9 : i32 to vector<1x256xi32>
    %14 = arith.cmpi eq, %12, %13 : vector<1x256xi32>
    %cst_10 = arith.constant 0.000000e+00 : f32
    %15 = vector.shape_cast %14 : vector<1x256xi1> to vector<1x256xi1>
    %16 = vector.broadcast %15 : vector<1x256xi1> to vector<32x256xi1>
    %17 = vector.broadcast %cst_10 : f32 to vector<32x256xf32>
    %18 = arith.select %16, %11, %17 : vector<32x256xi1>, vector<32x256xf32>
    %c0_11 = arith.constant 0 : index
    %c0_12 = arith.constant 0 : index
    %c0_13 = arith.constant 0 : index
    %19 = vector.load %arg6[%c0_11, %c0_12, %c0_13] : memref<1x2x32xf32, #tpu.memory_space<vmem>>, vector<1x1x32xf32>
    %20 = vector.shape_cast %19 : vector<1x1x32xf32> to vector<32xf32>
    %cst_14 = arith.constant dense<0xFF800000> : vector<32xf32>
    %21 = vector.multi_reduction <maximumf>, %18, %cst_14 [1] : vector<32x256xf32> to vector<32xf32>
    %22 = arith.maximumf %20, %21 : vector<32xf32>
    %c0_15 = arith.constant 0 : index
    %c0_16 = arith.constant 0 : index
    %c0_17 = arith.constant 0 : index
    %23 = vector.load %arg6[%c0_15, %c0_16, %c0_17] : memref<1x2x32xf32, #tpu.memory_space<vmem>>, vector<1x1x32xf32>
    %24 = vector.shape_cast %23 : vector<1x1x32xf32> to vector<32xf32>
    %25 = vector.shape_cast %22 : vector<32xf32> to vector<1x1x32xf32>
    tpu.vector_store %arg6[%c0_15, %c0_16, %c0_17], %25 {strides = array<i32>} : memref<1x2x32xf32, #tpu.memory_space<vmem>>, vector<1x1x32xf32>,
    %c1_i32 = arith.constant 1 : i32
    %26 = vector.broadcast %c1_i32 : i32 to vector<1x256xi32>
    %27 = arith.cmpi eq, %12, %26 : vector<1x256xi32>
    %cst_18 = arith.constant 0.000000e+00 : f32
    %28 = vector.shape_cast %27 : vector<1x256xi1> to vector<1x256xi1>
    %29 = vector.broadcast %28 : vector<1x256xi1> to vector<32x256xi1>
    %30 = vector.broadcast %cst_18 : f32 to vector<32x256xf32>
    %31 = arith.select %29, %11, %30 : vector<32x256xi1>, vector<32x256xf32>
    %c0_19 = arith.constant 0 : index
    %c1 = arith.constant 1 : index
    %c0_20 = arith.constant 0 : index
    %32 = vector.load %arg6[%c0_19, %c1, %c0_20] : memref<1x2x32xf32, #tpu.memory_space<vmem>>, vector<1x1x32xf32>
    %33 = vector.shape_cast %32 : vector<1x1x32xf32> to vector<32xf32>
    %cst_21 = arith.constant dense<0xFF800000> : vector<32xf32>
    %34 = vector.multi_reduction <maximumf>, %31, %cst_21 [1] : vector<32x256xf32> to vector<32xf32>
    %35 = arith.maximumf %33, %34 : vector<32xf32>
    %c0_22 = arith.constant 0 : index
    %c1_23 = arith.constant 1 : index
    %c0_24 = arith.constant 0 : index
    %36 = vector.load %arg6[%c0_22, %c1_23, %c0_24] : memref<1x2x32xf32, #tpu.memory_space<vmem>>, vector<1x1x32xf32>
    %37 = vector.shape_cast %36 : vector<1x1x32xf32> to vector<32xf32>
    %38 = vector.shape_cast %35 : vector<32xf32> to vector<1x1x32xf32>
    tpu.vector_store %arg6[%c0_22, %c1_23, %c0_24], %38 {strides = array<i32>} : memref<1x2x32xf32, #tpu.memory_space<vmem>>, vector<1x1x32xf32>,
    return
  }
  func.func @transform_0(%arg0: i32, %arg1: i32) -> (i32, i32) {
    %c2_i32 = arith.constant 2 : i32
    %0 = arith.muli %arg0, %c2_i32 : i32
    %1 = arith.addi %0, %arg1 : i32
    %c0_i32 = arith.constant 0 : i32
    %c0_i32_0 = arith.constant 0 : i32
    return %c0_i32, %1 : i32, i32
  }
  func.func @transform_1(%arg0: i32, %arg1: i32) -> (i32, i32) {
    %c2_i32 = arith.constant 2 : i32
    %0 = arith.muli %arg0, %c2_i32 : i32
    %1 = arith.addi %0, %arg1 : i32
    %c0_i32 = arith.constant 0 : i32
    %c0_i32_0 = arith.constant 0 : i32
    return %c0_i32, %1 : i32, i32
  }
  func.func @transform_2(%arg0: i32, %arg1: i32) -> (i32, i32) {
    %c0_i32 = arith.constant 0 : i32
    %c0_i32_0 = arith.constant 0 : i32
    %c0_i32_1 = arith.constant 0 : i32
    return %c0_i32, %c0_i32_0 : i32, i32
  }
  func.func @transform_3(%arg0: i32, %arg1: i32) -> (i32, i32) {
    %c0_i32 = arith.constant 0 : i32
    %c0_i32_0 = arith.constant 0 : i32
    %c0_i32_1 = arith.constant 0 : i32
    return %c0_i32, %c0_i32_0 : i32, i32
  }
  func.func @transform_4(%arg0: i32, %arg1: i32) -> (i32, i32, i32) {
    %c0_i32 = arith.constant 0 : i32
    %c0_i32_0 = arith.constant 0 : i32
    %c0_i32_1 = arith.constant 0 : i32
    return %arg0, %c0_i32, %c0_i32_0 : i32, i32, i32
  }
}

</mosaic_0001>

<llo_original>
// kernel: stn_forward.3
$region0: #{stn_forward.3}
  #allocation0 [shape = 'u32[]', space=smem, size = 0x4, offset = 0x4, fixed_abs, tag = 'smem constant byte address 0x4 - core index']
  #allocation1 [shape = 'u32[144,128]{1,0:T(1,128)}', space=vmem, size = 0x12000, scoped, tag = 'internal scratch']
  %s0 = inlined_call_operand.vmem [shape: s32[1,1024], index: 0, kind: input, shape index: {}]
  %s1 = inlined_call_operand.vmem [shape: bf16[6,1024], index: 1, kind: input, shape index: {}]
  %s2 = inlined_call_operand.vmem [shape: f32[9,2], index: 2, kind: input, shape index: {}]
  %s3 = inlined_call_operand.vmem [shape: bf16[6,1024], index: 3, kind: output, shape index: {}]
  %s4 = sld [smem:[#allocation0]]
  $region45: #{stn_forward.3} parent=0
    _
  %s6 = ssub.s32 1, %s4
  %s7 = scalar_select 0, %s6, %s4
  loop: start=0, step=1, limit=6
  $region2: #{stn_forward.3} parent=0 // loop_pre_header
    _
  $region3: #{stn_forward.3} parent=0 // loop_header
    %s9 = sphi 0, %s13
    %p10 = scmp.ge.s32.totalorder %s9, 6
    %s19 = sphi 0, %s21
    %s22 = sphi 0, %s19
    %s23 = sphi 0, %s22
    %s39 = sphi 0, %s23
    %s45 = sphi 0, %s47
    %s48 = sphi 0, %s45
    %s49 = sphi 0, %s48
    %s65 = sphi 0, %s49
    %s69 = sphi 0, %s69
    %s71 = sphi 0, %s69
    %s72 = sphi 0, %s71
    %s86 = sphi 0, %s72
    %s92 = sphi 0, %s94
    %s95 = sphi 0, %s92
    %s96 = sphi 0, %s95
    %s112 = sphi 0, %s96
  $region4: #{stn_forward.3} parent=0 // loop_header_branch
    %12 = sbr.rel (%p10) target = $region8
  $region5: #{stn_forward.3} parent=0 // loop_body
    %s14 = ssub.s32 %s9, 1
    %s15 = ssub.s32 %s9, 2
    %s16 = sadd.s32 %s9, 1
    %s17 = ssub.s32 %s9, %s16
    %p18 = scmp.eq.s32.totalorder %s17, 0
    %s20 = sadd.s32 %s19, 1
    %s21 = scalar_select %p18, %s19, %s20
    %p24 = pneg %p18
    %p25 = scmp.eq.s32.totalorder %s9, 3
    %p26 = por %p24, %p25
    %p27 = scmp.ne.s32.totalorder %s19, %s22
    %p28 = scmp.eq.s32.totalorder %s9, 0
    %p29 = por %p27, %p28
    %p30 = scmp.ne.s32.totalorder %s19, %s22
    %p31 = scmp.eq.s32.totalorder %s14, 3
    %p32 = por %p30, %p31
    %p33 = scmp.ne.s32.totalorder %s22, %s23
    %p34 = scmp.eq.s32.totalorder %s14, 0
    %p35 = por %p33, %p34
    %p36 = scmp.ne.s32.totalorder %s22, %s23
    %p37 = scmp.eq.s32.totalorder %s15, 3
    %p38 = por %p36, %p37
    %p40 = scmp.ne.s32.totalorder %s23, %s39
    %p41 = scmp.eq.s32.totalorder %s15, 0
    %p42 = por %p40, %p41
    %s43 = ssub.s32 %s9, %s16
    %p44 = scmp.eq.s32.totalorder %s43, 0
    %s46 = sadd.s32 %s45, 1
    %s47 = scalar_select %p44, %s45, %s46
    %p50 = pneg %p44
    %p51 = scmp.eq.s32.totalorder %s9, 3
    %p52 = por %p50, %p51
    %p53 = scmp.ne.s32.totalorder %s45, %s48
    %p54 = scmp.eq.s32.totalorder %s9, 0
    %p55 = por %p53, %p54
    %p56 = scmp.ne.s32.totalorder %s45, %s48
    %p57 = scmp.eq.s32.totalorder %s14, 3
    %p58 = por %p56, %p57
    %p59 = scmp.ne.s32.totalorder %s48, %s49
    %p60 = scmp.eq.s32.totalorder %s14, 0
    %p61 = por %p59, %p60
    %p62 = scmp.ne.s32.totalorder %s48, %s49
    %p63 = scmp.eq.s32.totalorder %s15, 3
    %p64 = por %p62, %p63
    %p66 = scmp.ne.s32.totalorder %s49, %s65
    %p67 = scmp.eq.s32.totalorder %s15, 0
    %p68 = por %p66, %p67
    %s70 = sadd.s32 %s69, 1
    %p73 = scmp.eq.s32.totalorder %s9, 3
    %p74 = scmp.ne.s32.totalorder %s69, %s71
    %p75 = scmp.eq.s32.totalorder %s9, 0
    %p76 = por %p74, %p75
    %p77 = scmp.ne.s32.totalorder %s69, %s71
    %p78 = scmp.eq.s32.totalorder %s14, 3
    %p79 = por %p77, %p78
    %p80 = scmp.ne.s32.totalorder %s71, %s72
    %p81 = scmp.eq.s32.totalorder %s14, 0
    %p82 = por %p80, %p81
    %p83 = scmp.ne.s32.totalorder %s71, %s72
    %p84 = scmp.eq.s32.totalorder %s15, 3
    %p85 = por %p83, %p84
    %p87 = scmp.ne.s32.totalorder %s72, %s86
    %p88 = scmp.eq.s32.totalorder %s15, 0
    %p89 = por %p87, %p88
    %s90 = ssub.s32 %s9, %s16
    %p91 = scmp.eq.s32.totalorder %s90, 0
    %s93 = sadd.s32 %s92, 1
    %s94 = scalar_select %p91, %s92, %s93
    %p97 = pneg %p91
    %p98 = scmp.eq.s32.totalorder %s9, 3
    %p99 = por %p97, %p98
    %p100 = scmp.ne.s32.totalorder %s92, %s95
    %p101 = scmp.eq.s32.totalorder %s9, 0
    %p102 = por %p100, %p101
    %p103 = scmp.ne.s32.totalorder %s92, %s95
    %p104 = scmp.eq.s32.totalorder %s14, 3
    %p105 = por %p103, %p104
    %p106 = scmp.ne.s32.totalorder %s95, %s96
    %p107 = scmp.eq.s32.totalorder %s14, 0
    %p108 = por %p106, %p107
    %p109 = scmp.ne.s32.totalorder %s95, %s96
    %p110 = scmp.eq.s32.totalorder %s15, 3
    %p111 = por %p109, %p110
    %p113 = scmp.ne.s32.totalorder %s96, %s112
    %p114 = scmp.eq.s32.totalorder %s15, 0
    %p115 = por %p113, %p114
    %p116 = scmp.le.s32.totalorder 1, %s9
    %p117 = scmp.lt.s32.totalorder %s9, 5
    %p118 = pnand %p116, %p117
    %p119 = pneg %p118
    // Predicated region
    $region9: #{stn_forward.3} parent=5 // pred_check
      _
    $region10: #{stn_forward.3} parent=5 // pred_check_branch
      %121 = sbr.rel (%p118) target = $region12
    $region11: #{stn_forward.3} parent=5 // pred_region
      %s122 = ssub.s32 %s9, 1
      // Predicated region
      $region13: #{stn_forward.3} parent=11 // pred_check
        %p123 = pneg %p82
      $region14: #{stn_forward.3} parent=11 // pred_check_branch
        %125 = sbr.rel (%p123) target = $region16
      $region15: #{stn_forward.3} parent=11 // pred_region
        _
      $region16: #{stn_forward.3} parent=11 // pred_fallthru
        _
    $region12: #{stn_forward.3} parent=5 // pred_fallthru
      _
    %p126 = scmp.lt.s32.totalorder %s9, 4
    // Predicated region
    $region17: #{stn_forward.3} parent=5 // pred_check
      %p127 = pneg %p126
    $region18: #{stn_forward.3} parent=5 // pred_check_branch
      %129 = sbr.rel (%p127) target = $region20
    $region19: #{stn_forward.3} parent=5 // pred_region
      // Predicated region
      $region21: #{stn_forward.3} parent=19 // pred_check
        %p130 = pneg %p29
      $region22: #{stn_forward.3} parent=19 // pred_check_branch
        %132 = sbr.rel (%p130) target = $region24
      $region23: #{stn_forward.3} parent=19 // pred_region
        %s133 = smul.u32 2, %s9
        %p134 = scmp.lt.s32.totalorder %s133, 7
        %s135 = scalar_select %p134, %s133, 7
        %s136 = scalar_lea.vmem %s0, %s135
        %s137 = smul.u32 2, %s9
      $region24: #{stn_forward.3} parent=19 // pred_fallthru
        _
      // Predicated region
      $region25: #{stn_forward.3} parent=19 // pred_check
        %p138 = pneg %p55
      $region26: #{stn_forward.3} parent=19 // pred_check_branch
        %140 = sbr.rel (%p138) target = $region28
      $region27: #{stn_forward.3} parent=19 // pred_region
        %s141 = smul.u32 2, %s9
        %p142 = scmp.lt.s32.totalorder %s141, 7
        %s143 = scalar_select %p142, %s141, 7
        %s144 = smul.addr %s143, 4
        %s145 = scalar_lea.vmem %s1, %s144
        %s146 = smul.u32 2, %s9
      $region28: #{stn_forward.3} parent=19 // pred_fallthru
        _
    $region20: #{stn_forward.3} parent=5 // pred_fallthru
      _
    %p147 = scmp.le.s32.totalorder 1, %s9
    %p148 = scmp.lt.s32.totalorder %s9, 5
    %p149 = pnand %p147, %p148
    %p150 = pneg %p149
    // Predicated region
    $region29: #{stn_forward.3} parent=5 // pred_check
      _
    $region30: #{stn_forward.3} parent=5 // pred_check_branch
      %152 = sbr.rel (%p149) target = $region32
    $region31: #{stn_forward.3} parent=5 // pred_region
      %s153 = ssub.s32 %s9, 1
      %s154 = smul.u32 2, %s14
      %p155 = scmp.lt.s32.totalorder %s154, 7
      %s156 = scalar_select %p155, %s154, 7
      %s157 = scalar_lea.vmem %s0, %s156
      %p158 = pneg %p35
      %p159 = pneg %p32
      %s160 = smul.u32 2, %s14
      %p161 = scmp.lt.s32.totalorder %s160, 7
      %s162 = scalar_select %p161, %s160, 7
      %s163 = smul.addr %s162, 4
      %s164 = scalar_lea.vmem %s1, %s163
      %p165 = pneg %p61
      %p166 = pneg %p58
      %p167 = pneg %p82
      %p168 = pneg %p79
      %p169 = pneg %p108
      %p170 = pneg %p105
      %s171 = smul.u32 2, %s14
      %p172 = scmp.lt.s32.totalorder %s171, 7
      %s173 = scalar_select %p172, %s171, 7
      %s174 = smul.addr %s173, 4
      %s175 = scalar_lea.vmem %s3, %s174
      %s176 = smul.u32 2, %s14
      %p177 = scmp.lt.s32.totalorder %s176, 7
      %s178 = scalar_select %p177, %s176, 7
      %s179 = scalar_lea.vmem %s0, %s178
      %s180 = smul.u32 2, %s14
      %s181 = smul.u32 2, %s14
      %p182 = scmp.lt.s32.totalorder %s181, 7
      %s183 = scalar_select %p182, %s181, 7
      %s184 = smul.addr %s183, 4
      %s185 = scalar_lea.vmem %s1, %s184
      %s186 = smul.u32 2, %s14
      %s187 = smul.u32 2, %s14
      %p188 = scmp.lt.s32.totalorder %s187, 7
      %s189 = scalar_select %p188, %s187, 7
      %s190 = smul.addr %s189, 4
      %s191 = scalar_lea.vmem %s3, %s190
      %s192 = smul.u32 2, %s14
      %v193 = vld [vmem:[%s185] sm:$0x77]
      %v194 = vunpack.c.l.bf16 %v193
      %v195 = vunpack.c.h.bf16 %v193
      %v196 = vld [vmem:[%s179] sm:$0x3]
      %v197 = vlaneseq
      %v198 = vshrl.u32 %v197, 7
      %v199 = vlaneseq
      %v200 = vshrl.u32 %v199, 7
      %v201 = vsub.s32 0, %v200
      %v202 = vrot.slane %v196, %v201
      %v203 = vlaneseq
      %v204 = vshrl.u32 %v203, 7
      %v205 = vsub.s32 1, %v204
      %v206 = vrot.slane %v196, %v205
      %vm207 = vcmp.eq.s32.totalorder %v198, %v202
      %vm208 = vcmp.eq.s32.totalorder %v198, %v206
      %v209 = vsel %vm207, 1, 0
      %v210 = vsel %vm208, 1, 0
      %v211 = vcvt.s32.f32 %v209
      %v212 = vcvt.s32.f32 %v210
      %v213 = vld [vmem:[%s2] sm:$0xff]
      %v214 = vld [vmem:[%s2 + $0x8] sm:$0x1]
      %vm215 = vcmask 15360
      %v217 = vsel %vm215, %v213, 0
      %v220 = vsel %vm215, %v214, 0
      %vm222 = vcmask 1041408
      %v224 = vsel %vm222, %v211, 0
      %v227 = vsel %vm222, %v212, 0
      %229 = vmatprep.subr.mxu0 0.0
      %230 = vmatpush1.msra.mxu0 0.0
      %231 = vmatprep.subr.mxu0 0.0
      %232 = vmatpush1.msra.mxu0 0.0
      %233 = vmatprep.subr.mxu0 0.0
      %234 = vmatpush1.msra.mxu0 0.0
      %235 = vmatprep.subr.mxu0 0.0
      %236 = vmatpush1.msra.mxu0 0.0
      %237 = vmatprep.subr.mxu0 0.0
      %238 = vmatpush1.msra.mxu0 0.0
      %239 = vmatprep.subr.mxu0 0.0
      %240 = vmatpush1.msra.mxu0 0.0
      %241 = vmatprep.subr.mxu0 0.0
      %242 = vmatpush1.msra.mxu0 0.0
      %243 = vmatprep.subr.mxu0 0.0
      %244 = vmatpush1.msra.mxu0 0.0
      %245 = vmatprep.subr.mxu0 0.0
      %246 = vmatpush1.msra.mxu0 0.0
      %247 = vmatprep.subr.mxu0 0.0
      %248 = vmatpush1.msra.mxu0 0.0
      %249 = vmatprep.subr.mxu0 0.0
      %250 = vmatpush1.msra.mxu0 0.0
      %251 = vmatprep.subr.mxu0 0.0
      %252 = vmatpush1.msra.mxu0 0.0
      %253 = vmatprep.subr.mxu0 0.0
      %254 = vmatpush1.msra.mxu0 0.0
      %255 = vmatprep.subr.mxu0 0.0
      %256 = vmatpush1.msra.mxu0 0.0
      %257 = vmatprep.subr.mxu0 0.0
      %258 = vmatpush1.msra.mxu0 0.0
      %259 = vmatprep.subr.mxu0 %v227
      %260 = vmatpush1.msra.mxu0 %v224
      %261 = vmatprep.subr.mxu0 0.0
      %262 = vmatpush2.msra.mxu0 0.0
      %263 = vmatprep.subr.mxu0 0.0
      %264 = vmatpush2.msra.mxu0 0.0
      %265 = vmatprep.subr.mxu0 0.0
      %266 = vmatpush2.msra.mxu0 0.0
      %267 = vmatprep.subr.mxu0 0.0
      %268 = vmatpush2.msra.mxu0 0.0
      %269 = vmatprep.subr.mxu0 0.0
      %270 = vmatpush2.msra.mxu0 0.0
      %271 = vmatprep.subr.mxu0 0.0
      %272 = vmatpush2.msra.mxu0 0.0
      %273 = vmatprep.subr.mxu0 0.0
      %274 = vmatpush2.msra.mxu0 0.0
      %275 = vmatprep.subr.mxu0 0.0
      %276 = vmatpush2.msra.mxu0 0.0
      %277 = vmatprep.subr.mxu0 0.0
      %278 = vmatpush2.msra.mxu0 0.0
      %279 = vmatprep.subr.mxu0 0.0
      %280 = vmatpush2.msra.mxu0 0.0
      %281 = vmatprep.subr.mxu0 0.0
      %282 = vmatpush2.msra.mxu0 0.0
      %283 = vmatprep.subr.mxu0 0.0
      %284 = vmatpush2.msra.mxu0 0.0
      %285 = vmatprep.subr.mxu0 0.0
      %286 = vmatpush2.msra.mxu0 0.0
      %287 = vmatprep.subr.mxu0 0.0
      %288 = vmatpush2.msra.mxu0 0.0
      %289 = vmatprep.subr.mxu0 0.0
      %290 = vmatpush2.msra.mxu0 0.0
      %291 = vmatprep.subr.mxu0 0.0
      %292 = vmatpush2.msra.mxu0 0.0
      %293 = vmatprep.mubr.f32.mxu0 0.0
      %294 = vmatmul.mubr.f32.gmra.mxu0 %v217
      %v295 = vpop.f32.mrf.mxu0
      %v296 = vadd.f32 0.0, %v295
      %v297 = vpop.f32.mrf.mxu0
      %v298 = vadd.f32 0.0, %v297
      %299 = vmatprep.mubr.f32.mxu0 0.0
      %300 = vmatmul.mubr.f32.gmra.mxu0 %v220
      %v301 = vpop.f32.mrf.mxu0
      %v302 = vadd.f32 0.0, %v301
      %v303 = vpop.f32.mrf.mxu0
      %v304 = vadd.f32 0.0, %v303
      %305 = vdwg.mxu0
      %v306 = vmul.f32 %v194, %v296
      %v307 = vmul.f32 %v195, %v298
      %v310 = vrot.slane %v296, 2
      %v311 = vrot.slane %v298, 2
      %v314 = vmul.f32 %v194, %v310
      %v315 = vmul.f32 %v195, %v311
      %v318 = vrot.slane %v314, 1
      %v319 = vrot.slane %v315, 1
      %v322 = vadd.f32 %v306, %v318
      %v323 = vadd.f32 %v307, %v319
      %v324 = vrot.slane %v296, 4
      %v325 = vrot.slane %v298, 4
      %v328 = vmul.f32 %v194, %v324
      %v329 = vmul.f32 %v195, %v325
      %v332 = vrot.slane %v328, 2
      %v333 = vrot.slane %v329, 2
      %v336 = vadd.f32 %v322, %v332
      %v337 = vadd.f32 %v323, %v333
      %v338 = vpack.c.bf16 %v336, %v336
      %v339 = vpack.c.bf16 %v337, %v337
      %v342 = vunpack.c.l.b16 %v338
      %v343 = vunpack.c.l.b16 %v339
      %v344 = vpack.c.b16 %v343, %v342
      %vm346 = vcmask 1040384
      %vm347 = vsmask.f32 256
      %vm348 = vmand %vm346, %vm347
      %vm349 = vcmask 1044484
      %vm350 = vsmask.f32 4352
      %vm351 = vmand %vm349, %vm350
      %vm352 = vmor %vm351, %vm348
      %v353 = vld [vmem:[%s191] sm:$0x11]
      %v354 = vsel %vm352, %v344, %v353
      %355 = vst [vmem:[%s191] sm:$0x11] %v354
      %v356 = vrot.slane %v296, 1
      %v357 = vrot.slane %v298, 1
      %v360 = vmul.f32 %v194, %v356
      %v361 = vmul.f32 %v195, %v357
      %v362 = vrot.slane %v296, 3
      %v363 = vrot.slane %v298, 3
      %v366 = vmul.f32 %v194, %v362
      %v367 = vmul.f32 %v195, %v363
      %v370 = vrot.slane %v366, 1
      %v371 = vrot.slane %v367, 1
      %v374 = vadd.f32 %v360, %v370
      %v375 = vadd.f32 %v361, %v371
      %v376 = vrot.slane %v296, 5
      %v377 = vrot.slane %v298, 5
      %v380 = vmul.f32 %v194, %v376
      %v381 = vmul.f32 %v195, %v377
      %v384 = vrot.slane %v380, 2
      %v385 = vrot.slane %v381, 2
      %v388 = vadd.f32 %v374, %v384
      %v389 = vadd.f32 %v375, %v385
      %v390 = vpack.c.bf16 %v388, %v388
      %v391 = vpack.c.bf16 %v389, %v389
      %v394 = vunpack.c.l.b16 %v390
      %v395 = vunpack.c.l.b16 %v391
      %v396 = vpack.c.b16 %v395, %v394
      %v398 = vshll.u32 %v396, 16
      %vm401 = vsmask.f32 7938
      %vm402 = vmand %vm346, %vm401
      %vm403 = vsmask.f32 7954
      %vm404 = vmand %vm349, %vm403
      %vm405 = vmor %vm404, %vm402
      %v406 = vld [vmem:[%s191] sm:$0x11]
      %v407 = vsel %vm405, %v398, %v406
      %408 = vst [vmem:[%s191] sm:$0x11] %v407
      %v409 = vrot.slane %v328, 1
      %v410 = vrot.slane %v329, 1
      %v413 = vadd.f32 %v314, %v409
      %v414 = vadd.f32 %v315, %v410
      %v417 = vrot.slane %v302, 6
      %v418 = vrot.slane %v304, 6
      %v421 = vmul.f32 %v194, %v417
      %v422 = vmul.f32 %v195, %v418
      %v425 = vrot.slane %v421, 2
      %v426 = vrot.slane %v422, 2
      %v429 = vadd.f32 %v413, %v425
      %v430 = vadd.f32 %v414, %v426
      %v431 = vpack.c.bf16 %v429, %v429
      %v432 = vpack.c.bf16 %v430, %v430
      %v435 = vunpack.c.l.b16 %v431
      %v436 = vunpack.c.l.b16 %v432
      %v437 = vpack.c.b16 %v436, %v435
      %v438 = vrot.slane %v437, 7
      %vm440 = vcmask 1041409
      %vm441 = vsmask.f32 1280
      %vm442 = vmand %vm440, %vm441
      %vm443 = vcmask 1045509
      %vm444 = vsmask.f32 5376
      %vm445 = vmand %vm443, %vm444
      %vm446 = vmor %vm445, %vm442
      %v447 = vld [vmem:[%s191] sm:$0x22]
      %v448 = vsel %vm446, %v438, %v447
      %449 = vst [vmem:[%s191] sm:$0x22] %v448
      %vm450 = vcmask 1042433
      %vm451 = vsmask.f32 7942
      %vm452 = vmand %vm450, %vm451
      %vm453 = vcmask 1046533
      %vm454 = vsmask.f32 7958
      %vm455 = vmand %vm453, %vm454
      %vm456 = vmor %vm455, %vm452
      %v457 = vld [vmem:[%s191] sm:$0x66]
      %v458 = vsel %vm456, %v193, %v457
      %459 = vst [vmem:[%s191] sm:$0x66] %v458
      %s460 = smul.u32 2, %s14
      %p461 = scmp.lt.s32.totalorder %s460, 7
      %s462 = scalar_select %p461, %s460, 7
      %s463 = smul.addr %s462, 4
      %s464 = scalar_lea.vmem %s3, %s463
      // Predicated region
      $region33: #{stn_forward.3} parent=31 // pred_check
        %p465 = pneg %p105
      $region34: #{stn_forward.3} parent=31 // pred_check_branch
        %467 = sbr.rel (%p465) target = $region36
      $region35: #{stn_forward.3} parent=31 // pred_region
        %s468 = smul.u32 2, %s14
      $region36: #{stn_forward.3} parent=31 // pred_fallthru
        _
    $region32: #{stn_forward.3} parent=5 // pred_fallthru
      _
    %p469 = scmp.le.s32.totalorder 2, %s9
    // Predicated region
    $region37: #{stn_forward.3} parent=5 // pred_check
      %p470 = pneg %p469
    $region38: #{stn_forward.3} parent=5 // pred_check_branch
      %472 = sbr.rel (%p470) target = $region40
    $region39: #{stn_forward.3} parent=5 // pred_region
      %s473 = ssub.s32 %s9, 2
      // Predicated region
      $region41: #{stn_forward.3} parent=39 // pred_check
        %p474 = pneg %p111
      $region42: #{stn_forward.3} parent=39 // pred_check_branch
        %476 = sbr.rel (%p474) target = $region44
      $region43: #{stn_forward.3} parent=39 // pred_region
        %s477 = smul.u32 2, %s15
        %p478 = scmp.lt.s32.totalorder %s477, 7
        %s479 = scalar_select %p478, %s477, 7
        %s480 = smul.addr %s479, 4
        %s481 = scalar_lea.vmem %s3, %s480
      $region44: #{stn_forward.3} parent=39 // pred_fallthru
        _
    $region40: #{stn_forward.3} parent=5 // pred_fallthru
      _
  $region6: #{stn_forward.3} parent=0 // loop_footer
    %s13 = sadd.s32 1, %s9
  $region7: #{stn_forward.3} parent=0 // loop_footer_branch
    %8 = sbr.rel target = $region3
  $region8: #{stn_forward.3} parent=0 // loop_exit
    _

// kernel: stn_forward.2
$region0: #{stn_forward.2}
  #allocation0 [shape = 'u32[]', space=smem, size = 0x4, offset = 0x4, fixed_abs, tag = 'smem constant byte address 0x4 - core index']
  #allocation1 [shape = 'u32[144,128]{1,0:T(1,128)}', space=vmem, size = 0x12000, scoped, tag = 'internal scratch']
  %s0 = inlined_call_operand.vmem [shape: s32[1,1024], index: 0, kind: input, shape index: {}]
  %s1 = inlined_call_operand.vmem [shape: bf16[4,1024], index: 1, kind: input, shape index: {}]
  %s2 = inlined_call_operand.vmem [shape: f32[32,4], index: 2, kind: input, shape index: {}]
  %s3 = inlined_call_operand.vmem [shape: f32[32,1], index: 3, kind: input, shape index: {}]
  %s4 = inlined_call_operand.vmem [shape: f32[2,2,32], index: 4, kind: output, shape index: {}]
  %s5 = sld [smem:[#allocation0]]
  $region53: #{stn_forward.2} parent=0
    _
  %s7 = ssub.s32 1, %s5
  %s8 = scalar_select 0, %s7, %s5
  loop: start=0, step=1, limit=6
  $region2: #{stn_forward.2} parent=0 // loop_pre_header
    _
  $region3: #{stn_forward.2} parent=0 // loop_header
    %s10 = sphi 0, %s14
    %p11 = scmp.ge.s32.totalorder %s10, 6
    %s17 = sphi 0, %s29
    %s18 = sphi 0, %s25
    %s19 = sphi 0, %s17
    %s20 = sphi 0, %s18
    %s21 = sphi 0, %s19
    %s22 = sphi 0, %s20
    %s36 = sphi 0, %s38
    %s39 = sphi 0, %s36
    %s40 = sphi 0, %s39
    %s56 = sphi 0, %s40
    %s66 = sphi 0, %s68
    %s69 = sphi 0, %s66
    %s70 = sphi 0, %s69
    %s86 = sphi 0, %s70
    %s90 = sphi 0, %s90
    %s92 = sphi 0, %s90
    %s93 = sphi 0, %s92
    %s107 = sphi 0, %s93
    %s111 = sphi 0, %s111
    %s113 = sphi 0, %s111
    %s114 = sphi 0, %s113
    %s128 = sphi 0, %s114
    %s134 = sphi 0, %s136
    %s137 = sphi 0, %s134
    %s138 = sphi 0, %s137
    %s154 = sphi 0, %s138
  $region4: #{stn_forward.2} parent=0 // loop_header_branch
    %13 = sbr.rel (%p11) target = $region8
  $region5: #{stn_forward.2} parent=0 // loop_body
    %s15 = ssub.s32 %s10, 1
    %s16 = ssub.s32 %s10, 2
    %s23 = sadd.s32 1, %s18
    %p24 = scmp.ge.s32.totalorder %s23, 2
    %s25 = scalar_select %p24, 0, %s23
    %s26 = sadd.s32 1, %s17
    %s27 = scalar_select %p24, %s26, %s17
    %p28 = scmp.ge.s32.totalorder %s27, 2
    %s29 = scalar_select %p28, 0, %s27
    %s30 = smul.u32 %s17, 2
    %s31 = sadd.s32 %s30, %s18
    %s32 = smul.u32 %s29, 2
    %s33 = sadd.s32 %s32, %s25
    %s34 = ssub.s32 %s31, %s33
    %p35 = scmp.eq.s32.totalorder %s34, 0
    %s37 = sadd.s32 %s36, 1
    %s38 = scalar_select %p35, %s36, %s37
    %p41 = pneg %p35
    %p42 = scmp.eq.s32.totalorder %s10, 3
    %p43 = por %p41, %p42
    %p44 = scmp.ne.s32.totalorder %s36, %s39
    %p45 = scmp.eq.s32.totalorder %s10, 0
    %p46 = por %p44, %p45
    %p47 = scmp.ne.s32.totalorder %s36, %s39
    %p48 = scmp.eq.s32.totalorder %s15, 3
    %p49 = por %p47, %p48
    %p50 = scmp.ne.s32.totalorder %s39, %s40
    %p51 = scmp.eq.s32.totalorder %s15, 0
    %p52 = por %p50, %p51
    %p53 = scmp.ne.s32.totalorder %s39, %s40
    %p54 = scmp.eq.s32.totalorder %s16, 3
    %p55 = por %p53, %p54
    %p57 = scmp.ne.s32.totalorder %s40, %s56
    %p58 = scmp.eq.s32.totalorder %s16, 0
    %p59 = por %p57, %p58
    %s60 = smul.u32 %s17, 2
    %s61 = sadd.s32 %s60, %s18
    %s62 = smul.u32 %s29, 2
    %s63 = sadd.s32 %s62, %s25
    %s64 = ssub.s32 %s61, %s63
    %p65 = scmp.eq.s32.totalorder %s64, 0
    %s67 = sadd.s32 %s66, 1
    %s68 = scalar_select %p65, %s66, %s67
    %p71 = pneg %p65
    %p72 = scmp.eq.s32.totalorder %s10, 3
    %p73 = por %p71, %p72
    %p74 = scmp.ne.s32.totalorder %s66, %s69
    %p75 = scmp.eq.s32.totalorder %s10, 0
    %p76 = por %p74, %p75
    %p77 = scmp.ne.s32.totalorder %s66, %s69
    %p78 = scmp.eq.s32.totalorder %s15, 3
    %p79 = por %p77, %p78
    %p80 = scmp.ne.s32.totalorder %s69, %s70
    %p81 = scmp.eq.s32.totalorder %s15, 0
    %p82 = por %p80, %p81
    %p83 = scmp.ne.s32.totalorder %s69, %s70
    %p84 = scmp.eq.s32.totalorder %s16, 3
    %p85 = por %p83, %p84
    %p87 = scmp.ne.s32.totalorder %s70, %s86
    %p88 = scmp.eq.s32.totalorder %s16, 0
    %p89 = por %p87, %p88
    %s91 = sadd.s32 %s90, 1
    %p94 = scmp.eq.s32.totalorder %s10, 3
    %p95 = scmp.ne.s32.totalorder %s90, %s92
    %p96 = scmp.eq.s32.totalorder %s10, 0
    %p97 = por %p95, %p96
    %p98 = scmp.ne.s32.totalorder %s90, %s92
    %p99 = scmp.eq.s32.totalorder %s15, 3
    %p100 = por %p98, %p99
    %p101 = scmp.ne.s32.totalorder %s92, %s93
    %p102 = scmp.eq.s32.totalorder %s15, 0
    %p103 = por %p101, %p102
    %p104 = scmp.ne.s32.totalorder %s92, %s93
    %p105 = scmp.eq.s32.totalorder %s16, 3
    %p106 = por %p104, %p105
    %p108 = scmp.ne.s32.totalorder %s93, %s107
    %p109 = scmp.eq.s32.totalorder %s16, 0
    %p110 = por %p108, %p109
    %s112 = sadd.s32 %s111, 1
    %p115 = scmp.eq.s32.totalorder %s10, 3
    %p116 = scmp.ne.s32.totalorder %s111, %s113
    %p117 = scmp.eq.s32.totalorder %s10, 0
    %p118 = por %p116, %p117
    %p119 = scmp.ne.s32.totalorder %s111, %s113
    %p120 = scmp.eq.s32.totalorder %s15, 3
    %p121 = por %p119, %p120
    %p122 = scmp.ne.s32.totalorder %s113, %s114
    %p123 = scmp.eq.s32.totalorder %s15, 0
    %p124 = por %p122, %p123
    %p125 = scmp.ne.s32.totalorder %s113, %s114
    %p126 = scmp.eq.s32.totalorder %s16, 3
    %p127 = por %p125, %p126
    %p129 = scmp.ne.s32.totalorder %s114, %s128
    %p130 = scmp.eq.s32.totalorder %s16, 0
    %p131 = por %p129, %p130
    %s132 = ssub.s32 %s17, %s29
    %p133 = scmp.eq.s32.totalorder %s132, 0
    %s135 = sadd.s32 %s134, 1
    %s136 = scalar_select %p133, %s134, %s135
    %p139 = pneg %p133
    %p140 = scmp.eq.s32.totalorder %s10, 3
    %p141 = por %p139, %p140
    %p142 = scmp.ne.s32.totalorder %s134, %s137
    %p143 = scmp.eq.s32.totalorder %s10, 0
    %p144 = por %p142, %p143
    %p145 = scmp.ne.s32.totalorder %s134, %s137
    %p146 = scmp.eq.s32.totalorder %s15, 3
    %p147 = por %p145, %p146
    %p148 = scmp.ne.s32.totalorder %s137, %s138
    %p149 = scmp.eq.s32.totalorder %s15, 0
    %p150 = por %p148, %p149
    %p151 = scmp.ne.s32.totalorder %s137, %s138
    %p152 = scmp.eq.s32.totalorder %s16, 3
    %p153 = por %p151, %p152
    %p155 = scmp.ne.s32.totalorder %s138, %s154
    %p156 = scmp.eq.s32.totalorder %s16, 0
    %p157 = por %p155, %p156
    %p158 = scmp.le.s32.totalorder 1, %s10
    %p159 = scmp.lt.s32.totalorder %s10, 5
    %p160 = pnand %p158, %p159
    %p161 = pneg %p160
    // Predicated region
    $region9: #{stn_forward.2} parent=5 // pred_check
      _
    $region10: #{stn_forward.2} parent=5 // pred_check_branch
      %163 = sbr.rel (%p160) target = $region12
    $region11: #{stn_forward.2} parent=5 // pred_region
      %s164 = ssub.s32 %s10, 1
      // Predicated region
      $region13: #{stn_forward.2} parent=11 // pred_check
        %p165 = pneg %p103
      $region14: #{stn_forward.2} parent=11 // pred_check_branch
        %167 = sbr.rel (%p165) target = $region16
      $region15: #{stn_forward.2} parent=11 // pred_region
        _
      $region16: #{stn_forward.2} parent=11 // pred_fallthru
        _
      // Predicated region
      $region17: #{stn_forward.2} parent=11 // pred_check
        %p168 = pneg %p124
      $region18: #{stn_forward.2} parent=11 // pred_check_branch
        %170 = sbr.rel (%p168) target = $region20
      $region19: #{stn_forward.2} parent=11 // pred_region
        _
      $region20: #{stn_forward.2} parent=11 // pred_fallthru
        _
    $region12: #{stn_forward.2} parent=5 // pred_fallthru
      _
    %p171 = scmp.lt.s32.totalorder %s10, 4
    // Predicated region
    $region21: #{stn_forward.2} parent=5 // pred_check
      %p172 = pneg %p171
    $region22: #{stn_forward.2} parent=5 // pred_check_branch
      %174 = sbr.rel (%p172) target = $region24
    $region23: #{stn_forward.2} parent=5 // pred_region
      // Predicated region
      $region25: #{stn_forward.2} parent=23 // pred_check
        %p175 = pneg %p46
      $region26: #{stn_forward.2} parent=23 // pred_check_branch
        %177 = sbr.rel (%p175) target = $region28
      $region27: #{stn_forward.2} parent=23 // pred_region
        %s178 = smul.u32 %s17, 2
        %s179 = sadd.s32 %s178, %s18
        %s180 = smul.u32 2, %s179
        %p181 = scmp.lt.s32.totalorder %s180, 7
        %s182 = scalar_select %p181, %s180, 7
        %s183 = scalar_lea.vmem %s0, %s182
        %s184 = smul.u32 %s17, 2
        %s185 = sadd.s32 %s184, %s18
        %s186 = smul.u32 2, %s185
      $region28: #{stn_forward.2} parent=23 // pred_fallthru
        _
      // Predicated region
      $region29: #{stn_forward.2} parent=23 // pred_check
        %p187 = pneg %p76
      $region30: #{stn_forward.2} parent=23 // pred_check_branch
        %189 = sbr.rel (%p187) target = $region32
      $region31: #{stn_forward.2} parent=23 // pred_region
        %s190 = smul.u32 %s17, 2
        %s191 = sadd.s32 %s190, %s18
        %s192 = smul.u32 2, %s191
        %p193 = scmp.lt.s32.totalorder %s192, 7
        %s194 = scalar_select %p193, %s192, 7
        %s195 = smul.addr %s194, 2
        %s196 = scalar_lea.vmem %s1, %s195
        %s197 = smul.u32 %s17, 2
        %s198 = sadd.s32 %s197, %s18
        %s199 = smul.u32 2, %s198
      $region32: #{stn_forward.2} parent=23 // pred_fallthru
        _
    $region24: #{stn_forward.2} parent=5 // pred_fallthru
      _
    %p200 = scmp.le.s32.totalorder 1, %s10
    %p201 = scmp.lt.s32.totalorder %s10, 5
    %p202 = pnand %p200, %p201
    %p203 = pneg %p202
    // Predicated region
    $region33: #{stn_forward.2} parent=5 // pred_check
      _
    $region34: #{stn_forward.2} parent=5 // pred_check_branch
      %205 = sbr.rel (%p202) target = $region36
    $region35: #{stn_forward.2} parent=5 // pred_region
      %s206 = ssub.s32 %s10, 1
      %s207 = smul.u32 %s19, 2
      %s208 = sadd.s32 %s207, %s20
      %s209 = smul.u32 2, %s208
      %p210 = scmp.lt.s32.totalorder %s209, 7
      %s211 = scalar_select %p210, %s209, 7
      %s212 = scalar_lea.vmem %s0, %s211
      %p213 = pneg %p52
      %p214 = pneg %p49
      %s215 = smul.u32 %s19, 2
      %s216 = sadd.s32 %s215, %s20
      %s217 = smul.u32 2, %s216
      %p218 = scmp.lt.s32.totalorder %s217, 7
      %s219 = scalar_select %p218, %s217, 7
      %s220 = smul.addr %s219, 2
      %s221 = scalar_lea.vmem %s1, %s220
      %p222 = pneg %p82
      %p223 = pneg %p79
      %p224 = pneg %p103
      %p225 = pneg %p100
      %p226 = pneg %p124
      %p227 = pneg %p121
      %p228 = pneg %p150
      %p229 = pneg %p147
      %p230 = scmp.lt.s32.totalorder %s19, 1
      %s231 = scalar_select %p230, %s19, 1
      %s232 = smul.addr %s231, 2
      %s233 = scalar_lea.vmem %s4, %s232
      %s234 = smul.u32 %s19, 2
      %s235 = sadd.s32 %s234, %s20
      %s236 = smul.u32 2, %s235
      %p237 = scmp.lt.s32.totalorder %s236, 7
      %s238 = scalar_select %p237, %s236, 7
      %s239 = scalar_lea.vmem %s0, %s238
      %s240 = smul.u32 %s19, 2
      %s241 = sadd.s32 %s240, %s20
      %s242 = smul.u32 2, %s241
      %s243 = smul.u32 %s19, 2
      %s244 = sadd.s32 %s243, %s20
      %s245 = smul.u32 2, %s244
      %p246 = scmp.lt.s32.totalorder %s245, 7
      %s247 = scalar_select %p246, %s245, 7
      %s248 = smul.addr %s247, 2
      %s249 = scalar_lea.vmem %s1, %s248
      %s250 = smul.u32 %s19, 2
      %s251 = sadd.s32 %s250, %s20
      %s252 = smul.u32 2, %s251
      %p253 = scmp.lt.s32.totalorder %s19, 1
      %s254 = scalar_select %p253, %s19, 1
      %s255 = smul.addr %s254, 2
      %s256 = scalar_lea.vmem %s4, %s255
      %p257 = scmp.eq.s32.totalorder %s20, 0
      // Predicated region
      $region37: #{stn_forward.2} parent=35 // pred_check
        %p258 = pneg %p257
      $region38: #{stn_forward.2} parent=35 // pred_check_branch
        %260 = sbr.rel (%p258) target = $region40
      $region39: #{stn_forward.2} parent=35 // pred_region
        %vm261 = vcmask 254976
        %262 = vst.msk [vmem:[%s256] sm:$0x3] %vm261, 0.0
      $region40: #{stn_forward.2} parent=35 // pred_fallthru
        _
      %v263 = vld [vmem:[%s249] sm:$0xf]
      %v264 = vunpack.c.l.bf16 %v263
      %v265 = vld [vmem:[%s2] sm:$0xff]
      %v266 = vld [vmem:[%s2 + $0x8] sm:$0xff]
      %v267 = vld [vmem:[%s2 + $0x10] sm:$0xff]
      %v268 = vld [vmem:[%s2 + $0x18] sm:$0xff]
      %v269 = vld [vmem:[%s3] sm:$0xff]
      %v270 = vld [vmem:[%s3 + $0x8] sm:$0xff]
      %v271 = vld [vmem:[%s3 + $0x10] sm:$0xff]
      %v272 = vld [vmem:[%s3 + $0x18] sm:$0xff]
      %274 = vset.pattern.permute.xlu0 0
      %275 = vperm.xlu0 %274, %v269
      %v276 = vpop.permute.xlu0 %275
      %279 = vset.pattern.permute.xlu0 0
      %280 = vperm.xlu0 %279, %v270
      %v281 = vpop.permute.xlu0 %280
      %284 = vset.pattern.permute.xlu0 0
      %285 = vperm.xlu0 %284, %v271
      %v286 = vpop.permute.xlu0 %285
      %289 = vset.pattern.permute.xlu0 0
      %290 = vperm.xlu0 %289, %v272
      %v291 = vpop.permute.xlu0 %290
      %v294 = vcombine.high %v264, %v264
      %vm295 = vcmask 31744
      %v297 = vsel %vm295, %v265, 0
      %v300 = vsel %vm295, %v266, 0
      %v303 = vsel %vm295, %v267, 0
      %v306 = vsel %vm295, %v268, 0
      %vm308 = vcmask 1043456
      %v309 = vsel %vm308, %v264, 0
      %v311 = vsel %vm308, %v294, 0
      %313 = vmatprep.subr.mxu0 0.0
      %314 = vmatpush1.msra.mxu0 0.0
      %315 = vmatprep.subr.mxu0 0.0
      %316 = vmatpush1.msra.mxu0 0.0
      %317 = vmatprep.subr.mxu0 0.0
      %318 = vmatpush1.msra.mxu0 0.0
      %319 = vmatprep.subr.mxu0 0.0
      %320 = vmatpush1.msra.mxu0 0.0
      %321 = vmatprep.subr.mxu0 0.0
      %322 = vmatpush1.msra.mxu0 0.0
      %323 = vmatprep.subr.mxu0 0.0
      %324 = vmatpush1.msra.mxu0 0.0
      %325 = vmatprep.subr.mxu0 0.0
      %326 = vmatpush1.msra.mxu0 0.0
      %327 = vmatprep.subr.mxu0 0.0
      %328 = vmatpush1.msra.mxu0 0.0
      %329 = vmatprep.subr.mxu0 0.0
      %330 = vmatpush1.msra.mxu0 0.0
      %331 = vmatprep.subr.mxu0 0.0
      %332 = vmatpush1.msra.mxu0 0.0
      %333 = vmatprep.subr.mxu0 0.0
      %334 = vmatpush1.msra.mxu0 0.0
      %335 = vmatprep.subr.mxu0 0.0
      %336 = vmatpush1.msra.mxu0 0.0
      %337 = vmatprep.subr.mxu0 0.0
      %338 = vmatpush1.msra.mxu0 0.0
      %339 = vmatprep.subr.mxu0 0.0
      %340 = vmatpush1.msra.mxu0 0.0
      %341 = vmatprep.subr.mxu0 0.0
      %342 = vmatpush1.msra.mxu0 0.0
      %343 = vmatprep.subr.mxu0 %v311
      %344 = vmatpush1.msra.mxu0 %v309
      %345 = vmatprep.subr.mxu0 0.0
      %346 = vmatpush2.msra.mxu0 0.0
      %347 = vmatprep.subr.mxu0 0.0
      %348 = vmatpush2.msra.mxu0 0.0
      %349 = vmatprep.subr.mxu0 0.0
      %350 = vmatpush2.msra.mxu0 0.0
      %351 = vmatprep.subr.mxu0 0.0
      %352 = vmatpush2.msra.mxu0 0.0
      %353 = vmatprep.subr.mxu0 0.0
      %354 = vmatpush2.msra.mxu0 0.0
      %355 = vmatprep.subr.mxu0 0.0
      %356 = vmatpush2.msra.mxu0 0.0
      %357 = vmatprep.subr.mxu0 0.0
      %358 = vmatpush2.msra.mxu0 0.0
      %359 = vmatprep.subr.mxu0 0.0
      %360 = vmatpush2.msra.mxu0 0.0
      %361 = vmatprep.subr.mxu0 0.0
      %362 = vmatpush2.msra.mxu0 0.0
      %363 = vmatprep.subr.mxu0 0.0
      %364 = vmatpush2.msra.mxu0 0.0
      %365 = vmatprep.subr.mxu0 0.0
      %366 = vmatpush2.msra.mxu0 0.0
      %367 = vmatprep.subr.mxu0 0.0
      %368 = vmatpush2.msra.mxu0 0.0
      %369 = vmatprep.subr.mxu0 0.0
      %370 = vmatpush2.msra.mxu0 0.0
      %371 = vmatprep.subr.mxu0 0.0
      %372 = vmatpush2.msra.mxu0 0.0
      %373 = vmatprep.subr.mxu0 0.0
      %374 = vmatpush2.msra.mxu0 0.0
      %375 = vmatprep.subr.mxu0 0.0
      %376 = vmatpush2.msra.mxu0 0.0
      %377 = vmatprep.mubr.f32.mxu0 0.0
      %378 = vmatmul.mubr.f32.gmra.mxu0 %v297
      %v379 = vpop.f32.mrf.mxu0
      %v380 = vadd.f32 %v276, %v379
      %v381 = vpop.f32.mrf.mxu0
      %v382 = vadd.f32 %v276, %v381
      %383 = vmatprep.mubr.f32.mxu0 0.0
      %384 = vmatmul.mubr.f32.gmra.mxu0 %v300
      %v385 = vpop.f32.mrf.mxu0
      %v386 = vadd.f32 %v281, %v385
      %v387 = vpop.f32.mrf.mxu0
      %v388 = vadd.f32 %v281, %v387
      %389 = vmatprep.mubr.f32.mxu0 0.0
      %390 = vmatmul.mubr.f32.gmra.mxu0 %v303
      %v391 = vpop.f32.mrf.mxu0
      %v392 = vadd.f32 %v286, %v391
      %v393 = vpop.f32.mrf.mxu0
      %v394 = vadd.f32 %v286, %v393
      %395 = vmatprep.mubr.f32.mxu0 0.0
      %396 = vmatmul.mubr.f32.gmra.mxu0 %v306
      %v397 = vpop.f32.mrf.mxu0
      %v398 = vadd.f32 %v291, %v397
      %v399 = vpop.f32.mrf.mxu0
      %v400 = vadd.f32 %v291, %v399
      %401 = vdwg.mxu0
      %v402 = vmax.f32 %v380, 0.0
      %v403 = vmax.f32 %v382, 0.0
      %v404 = vmax.f32 %v386, 0.0
      %v405 = vmax.f32 %v388, 0.0
      %v406 = vmax.f32 %v392, 0.0
      %v407 = vmax.f32 %v394, 0.0
      %v408 = vmax.f32 %v398, 0.0
      %v409 = vmax.f32 %v400, 0.0
      %v410 = vld [vmem:[%s239] sm:$0x3]
      %vm411 = vcmp.eq.s32.totalorder %v410, 0
      %v412 = vsel %vm411, 1, 0
      %v413 = vlaneseq
      %v414 = vshrl.u32 %v413, 7
      %v415 = vsub.s32 0, %v414
      %v416 = vrot.slane %v412, %v415
      %v417 = vlaneseq
      %v418 = vshrl.u32 %v417, 7
      %v419 = vsub.s32 1, %v418
      %v420 = vrot.slane %v412, %v419
      %vm421 = vcmp.eq.s32.totalorder %v416, 1
      %vm422 = vcmp.eq.s32.totalorder %v420, 1
      %v423 = vsel %vm421, %v402, 0.0
      %v424 = vsel %vm422, %v403, 0.0
      %v425 = vsel %vm421, %v404, 0.0
      %v426 = vsel %vm422, %v405, 0.0
      %v427 = vsel %vm421, %v406, 0.0
      %v428 = vsel %vm422, %v407, 0.0
      %v429 = vsel %vm421, %v408, 0.0
      %v430 = vsel %vm422, %v409, 0.0
      %v431 = vld [vmem:[%s256] sm:$0x1]
      %v432 = vmax.f32 %v423, %v424
      %433 = vmax.xlane.f32.xlu0 %v432
      %v434 = vpop.xlane.xlu0 %433
      %v435 = vmax.f32 %v425, %v426
      %436 = vmax.xlane.f32.xlu0 %v435
      %v437 = vpop.xlane.xlu0 %436
      %v438 = vmax.f32 %v427, %v428
      %439 = vmax.xlane.f32.xlu0 %v438
      %v440 = vpop.xlane.xlu0 %439
      %v441 = vmax.f32 %v429, %v430
      %442 = vmax.xlane.f32.xlu0 %v441
      %v443 = vpop.xlane.xlu0 %442
      %v448 = vlaneseq
      %v449 = vand.u32 %v448, 127
      %v450 = vlaneseq
      %v451 = vshrl.u32 %v450, 7
      %v452 = vsub.s32 %v449, %v451
      %v453 = vrot.slane %v434, %v452
      %v454 = vadd.s32 %v449, 4294967288
      %v455 = vlaneseq
      %v456 = vshrl.u32 %v455, 7
      %v457 = vsub.s32 %v454, %v456
      %v458 = vrot.slane %v437, %v457
      %vm459 = vcmask 130112
      %v460 = vsel %vm459, %v458, %v453
      %v461 = vadd.s32 %v449, 4294967280
      %v462 = vlaneseq
      %v463 = vshrl.u32 %v462, 7
      %v464 = vsub.s32 %v461, %v463
      %v465 = vrot.slane %v440, %v464
      %vm466 = vcmask 195712
      %v467 = vsel %vm466, %v465, %v460
      %v468 = vadd.s32 %v449, 4294967272
      %v469 = vlaneseq
      %v470 = vshrl.u32 %v469, 7
      %v471 = vsub.s32 %v468, %v470
      %v472 = vrot.slane %v443, %v471
      %vm473 = vcmask 261312
      %v474 = vsel %vm473, %v472, %v467
      %v476 = vmax.f32 %v431, %v474
      %vm477 = vcmask 253952
      %478 = vst.msk [vmem:[%s256] sm:$0x1] %vm477, %v476
      %vm479 = vcmp.eq.s32.totalorder %v410, 1
      %v480 = vsel %vm479, 1, 0
      %v481 = vlaneseq
      %v482 = vshrl.u32 %v481, 7
      %v483 = vsub.s32 0, %v482
      %v484 = vrot.slane %v480, %v483
      %v485 = vlaneseq
      %v486 = vshrl.u32 %v485, 7
      %v487 = vsub.s32 1, %v486
      %v488 = vrot.slane %v480, %v487
      %vm489 = vcmp.eq.s32.totalorder %v484, 1
      %vm490 = vcmp.eq.s32.totalorder %v488, 1
      %v491 = vsel %vm489, %v402, 0.0
      %v492 = vsel %vm490, %v403, 0.0
      %v493 = vsel %vm489, %v404, 0.0
      %v494 = vsel %vm490, %v405, 0.0
      %v495 = vsel %vm489, %v406, 0.0
      %v496 = vsel %vm490, %v407, 0.0
      %v497 = vsel %vm489, %v408, 0.0
      %v498 = vsel %vm490, %v409, 0.0
      %v499 = vld [vmem:[%s256 + $0x1] sm:$0x1]
      %v500 = vmax.f32 %v491, %v492
      %501 = vmax.xlane.f32.xlu0 %v500
      %v502 = vpop.xlane.xlu0 %501
      %v503 = vmax.f32 %v493, %v494
      %504 = vmax.xlane.f32.xlu0 %v503
      %v505 = vpop.xlane.xlu0 %504
      %v506 = vmax.f32 %v495, %v496
      %507 = vmax.xlane.f32.xlu0 %v506
      %v508 = vpop.xlane.xlu0 %507
      %v509 = vmax.f32 %v497, %v498
      %510 = vmax.xlane.f32.xlu0 %v509
      %v511 = vpop.xlane.xlu0 %510
      %v516 = vlaneseq
      %v517 = vshrl.u32 %v516, 7
      %v518 = vsub.s32 %v449, %v517
      %v519 = vrot.slane %v502, %v518
      %v520 = vlaneseq
      %v521 = vshrl.u32 %v520, 7
      %v522 = vsub.s32 %v454, %v521
      %v523 = vrot.slane %v505, %v522
      %v524 = vsel %vm459, %v523, %v519
      %v525 = vlaneseq
      %v526 = vshrl.u32 %v525, 7
      %v527 = vsub.s32 %v461, %v526
      %v528 = vrot.slane %v508, %v527
      %v529 = vsel %vm466, %v528, %v524
      %v530 = vlaneseq
      %v531 = vshrl.u32 %v530, 7
      %v532 = vsub.s32 %v468, %v531
      %v533 = vrot.slane %v511, %v532
      %v534 = vsel %vm473, %v533, %v529
      %v536 = vmax.f32 %v499, %v534
      %537 = vst.msk [vmem:[%s256 + $0x1] sm:$0x1] %vm477, %v536
      %p538 = scmp.lt.s32.totalorder %s19, 1
      %s539 = scalar_select %p538, %s19, 1
      %s540 = smul.addr %s539, 2
      %s541 = scalar_lea.vmem %s4, %s540
      // Predicated region
      $region41: #{stn_forward.2} parent=35 // pred_check
        %p542 = pneg %p147
      $region42: #{stn_forward.2} parent=35 // pred_check_branch
        %544 = sbr.rel (%p542) target = $region44
      $region43: #{stn_forward.2} parent=35 // pred_region
        _
      $region44: #{stn_forward.2} parent=35 // pred_fallthru
        _
    $region36: #{stn_forward.2} parent=5 // pred_fallthru
      _
    %p545 = scmp.le.s32.totalorder 2, %s10
    // Predicated region
    $region45: #{stn_forward.2} parent=5 // pred_check
      %p546 = pneg %p545
    $region46: #{stn_forward.2} parent=5 // pred_check_branch
      %548 = sbr.rel (%p546) target = $region48
    $region47: #{stn_forward.2} parent=5 // pred_region
      %s549 = ssub.s32 %s10, 2
      // Predicated region
      $region49: #{stn_forward.2} parent=47 // pred_check
        %p550 = pneg %p153
      $region50: #{stn_forward.2} parent=47 // pred_check_branch
        %552 = sbr.rel (%p550) target = $region52
      $region51: #{stn_forward.2} parent=47 // pred_region
        %p553 = scmp.lt.s32.totalorder %s21, 1
        %s554 = scalar_select %p553, %s21, 1
        %s555 = smul.addr %s554, 2
        %s556 = scalar_lea.vmem %s4, %s555
      $region52: #{stn_forward.2} parent=47 // pred_fallthru
        _
    $region48: #{stn_forward.2} parent=5 // pred_fallthru
      _
  $region6: #{stn_forward.2} parent=0 // loop_footer
    %s14 = sadd.s32 1, %s10
  $region7: #{stn_forward.2} parent=0 // loop_footer_branch
    %9 = sbr.rel target = $region3
  $region8: #{stn_forward.2} parent=0 // loop_exit
    _

</llo_original>
